<compile_context>
chip_gen: v5e
topology: v5e:2x2
jax: 0.10.0
libtpu: 0.0.40
codegen_flags: <defaults>
</compile_context>

<pallas_src>
import jax
import jax.numpy as jnp
from jax.experimental import pallas as pl
from jax.experimental.pallas import tpu as pltpu

LANE = 128


def _round_up(x, m):
    return ((x + m - 1) // m) * m


def _full2d(shape):
    return pl.BlockSpec(shape, lambda i: (0, 0))


# ---------------- Pallas kernels ----------------

def conv_stack_kernel(a_ref, x0_ref, w_ref, b_ref, o_ref, x_scr):
    """All GraphConv(aggr='add') + ReLU layers fused; grid axis = layer index.

    a_ref : (N, N)            bf16, resident across layers
    x0_ref: (N, Cpad)         bf16, padded input features
    w_ref : (1, 2*Cpad, Cpad) bf16, [W_rel ; W_root] for this layer (streamed)
    b_ref : (1, 1, Cpad)      f32 bias for this layer (streamed)
    o_ref : (N, Cpad)         f32 output (written on last layer only)
    x_scr : (N, Cpad)         f32 VMEM scratch holding X between layers
    """
    l = pl.program_id(0)
    nl = pl.num_programs(0)

    @pl.when(l == 0)
    def _():
        x_scr[...] = x0_ref[...].astype(jnp.float32)

    x_b16 = x_scr[...].astype(jnp.bfloat16)

    # aggregate: A @ X  (aggr='add', flow source -> target)
    agg = jnp.dot(a_ref[...], x_b16, preferred_element_type=jnp.float32)

    # merged projection: (A@X) @ W_rel + X @ W_root + b  as one MXU matmul
    cat = jnp.concatenate([agg.astype(jnp.bfloat16), x_b16], axis=-1)
    y = jnp.dot(cat, w_ref[0], preferred_element_type=jnp.float32) + b_ref[0]

    x_scr[...] = jnp.maximum(y, 0.0)

    @pl.when(l == nl - 1)
    def _():
        o_ref[...] = x_scr[...]


def mlp_sigmoid_kernel(x_ref, w1_ref, b1_ref, s1_ref, t1_ref,
                       w2_ref, b2_ref, o_ref):
    """PyG MLP([2h,3h,out]) + sigmoid, lane-padded to 128.

    Layer 1: Linear -> BatchNorm(eval, folded to scale/shift) -> ReLU
    Layer 2: plain Linear (plain_last=True), then sigmoid.
    """
    h = jnp.dot(x_ref[...], w1_ref[...],
                preferred_element_type=jnp.float32) + b1_ref[...]
    h = jnp.maximum(h * s1_ref[...] + t1_ref[...], 0.0)
    z = jnp.dot(h, w2_ref[...],
                preferred_element_type=jnp.float32) + b2_ref[...]
    o_ref[...] = jax.nn.sigmoid(z)


# ---------------- wrappers ----------------

def conv_stack(a, x0p, w_all, b_all):
    n, c_pad = x0p.shape
    nc = w_all.shape[0]
    return pl.pallas_call(
        conv_stack_kernel,
        grid=(nc,),
        in_specs=[
            pl.BlockSpec((n, n), lambda l: (0, 0)),             # A resident
            pl.BlockSpec((n, c_pad), lambda l: (0, 0)),         # X0 resident
            pl.BlockSpec((1, 2 * c_pad, c_pad), lambda l: (l, 0, 0)),  # per-layer W
            pl.BlockSpec((1, 1, c_pad), lambda l: (l, 0, 0)),          # per-layer b
        ],
        out_specs=pl.BlockSpec((n, c_pad), lambda l: (0, 0)),
        out_shape=jax.ShapeDtypeStruct((n, c_pad), jnp.float32),
        scratch_shapes=[pltpu.VMEM((n, c_pad), jnp.float32)],
        compiler_params=pltpu.CompilerParams(
            dimension_semantics=("arbitrary",),
            vmem_limit_bytes=32 * 1024 * 1024,
        ),
    )(a, x0p, w_all, b_all)


def mlp_sigmoid(x, w1, b1, s1, t1, w2, b2):
    m = x.shape[0]
    d_out = w2.shape[1]
    args = (x, w1, b1, s1, t1, w2, b2)
    return pl.pallas_call(
        mlp_sigmoid_kernel,
        grid=(1,),
        in_specs=[_full2d(a.shape) for a in args],
        out_specs=_full2d((m, d_out)),
        out_shape=jax.ShapeDtypeStruct((m, d_out), jnp.float32),
        compiler_params=pltpu.CompilerParams(
            dimension_semantics=("arbitrary",),
            vmem_limit_bytes=32 * 1024 * 1024,
        ),
    )(*args)


# ---------------- params ----------------

def init_params(key, in_channels, hidden_channels, out_channels, nc):
    params = {"convs": []}
    c_in = in_channels
    for _ in range(nc):
        key, k1, k2, k3 = jax.random.split(key, 4)
        bound = 1.0 / float(c_in) ** 0.5
        params["convs"].append({
            "w_rel": jax.random.uniform(k1, (c_in, hidden_channels), jnp.float32, -bound, bound),
            "w_root": jax.random.uniform(k2, (c_in, hidden_channels), jnp.float32, -bound, bound),
            "b": jax.random.uniform(k3, (1, hidden_channels), jnp.float32, -bound, bound),
        })
        c_in = hidden_channels

    h2, h3 = 2 * hidden_channels, 3 * hidden_channels
    key, k1, k2, k3, k4 = jax.random.split(key, 5)
    bnd1 = 1.0 / float(h2) ** 0.5
    bnd2 = 1.0 / float(h3) ** 0.5
    eps = 1e-5
    # BatchNorm1d eval with fresh running stats (mean=0, var=1, gamma=1, beta=0)
    bn_scale = 1.0 / (1.0 + eps) ** 0.5
    params["mlp"] = {
        "w1": jax.random.uniform(k1, (h2, h3), jnp.float32, -bnd1, bnd1),
        "b1": jax.random.uniform(k2, (1, h3), jnp.float32, -bnd1, bnd1),
        "s1": jnp.full((1, h3), bn_scale, jnp.float32),
        "t1": jnp.zeros((1, h3), jnp.float32),
        # final MLP layer is plain (PyG plain_last=True): Linear only
        "w2": jax.random.uniform(k3, (h3, out_channels), jnp.float32, -bnd2, bnd2),
        "b2": jax.random.uniform(k4, (1, out_channels), jnp.float32, -bnd2, bnd2),
    }
    return params


def pack_params(params, in_channels, hidden_channels, out_channels, nc):
    """Pad channel dims to 128 lanes and stack the per-layer conv weights."""
    c_pad = _round_up(max(in_channels, hidden_channels), LANE)
    w_all = jnp.zeros((nc, 2 * c_pad, c_pad), jnp.float32)
    b_all = jnp.zeros((nc, 1, c_pad), jnp.float32)
    c_in = in_channels
    for l, layer in enumerate(params["convs"]):
        w_all = w_all.at[l, :c_in, :hidden_channels].set(layer["w_rel"])
        w_all = w_all.at[l, c_pad:c_pad + c_in, :hidden_channels].set(layer["w_root"])
        b_all = b_all.at[l, 0, :hidden_channels].set(layer["b"][0])
        c_in = hidden_channels

    d1, d2 = 2 * hidden_channels, 3 * hidden_channels
    d1p, d2p = _round_up(d1, LANE), _round_up(d2, LANE)
    dop = _round_up(out_channels, LANE)
    m = params["mlp"]
    packed = {
        "c_pad": c_pad,
        "out_channels": out_channels,
        "w_all": w_all.astype(jnp.bfloat16),
        "b_all": b_all,
        "w1": jnp.zeros((d1p, d2p), jnp.float32).at[:d1, :d2].set(m["w1"]),
        "b1": jnp.zeros((1, d2p), jnp.float32).at[:, :d2].set(m["b1"]),
        "s1": jnp.ones((1, d2p), jnp.float32).at[:, :d2].set(m["s1"]),
        "t1": jnp.zeros((1, d2p), jnp.float32).at[:, :d2].set(m["t1"]),
        "w2": jnp.zeros((d2p, dop), jnp.float32).at[:d2, :out_channels].set(m["w2"]),
        "b2": jnp.zeros((1, dop), jnp.float32).at[:, :out_channels].set(m["b2"]),
    }
    return packed


# ---------------- model ----------------

def gconvstack_words_forward(packed, x, edge_index, batch, hidden_channels):
    # `batch` kept for API parity with the PyTorch module (unused in forward).
    n = x.shape[0]
    c_pad = packed["c_pad"]
    src, dst = edge_index[0], edge_index[1]

    # Dense adjacency built directly in bf16 (entries are exact small ints).
    # Messages flow source -> target (PyG flow='source_to_target').
    a = jnp.zeros((n, n), jnp.bfloat16).at[dst, src].add(jnp.bfloat16(1.0))
    x0p = jnp.zeros((n, c_pad), jnp.bfloat16).at[:, :x.shape[1]].set(
        x.astype(jnp.bfloat16))

    xh_pad = conv_stack(a, x0p, packed["w_all"], packed["b_all"])  # (n, c_pad) f32
    xh = xh_pad[:, :hidden_channels]

    x_cat = jnp.reshape(xh, (-1, 2 * hidden_channels))
    x1 = x_cat[:, :hidden_channels]
    x2 = x_cat[:, hidden_channels:]

    m_rows = x_cat.shape[0]
    d1p = packed["w1"].shape[0]
    x_mlp = jnp.zeros((m_rows, d1p), jnp.float32).at[:, :2 * hidden_channels].set(x_cat)

    out_pad = mlp_sigmoid(x_mlp, packed["w1"], packed["b1"], packed["s1"],
                          packed["t1"], packed["w2"], packed["b2"])
    out = out_pad[:, :packed["out_channels"]]
    return out, [x_cat, x1, x2]


if __name__ == "__main__":
    in_channels, hidden_channels, out_channels, nc = 8, 32, 4, 2
    num_nodes = 16  # must be even (reshape to (-1, 2*hidden))

    key = jax.random.PRNGKey(0)
    key, kx, kp = jax.random.split(key, 3)
    x = jax.random.normal(kx, (num_nodes, in_channels), jnp.float32)

    # deterministic bidirectional ring graph
    idx = jnp.arange(num_nodes, dtype=jnp.int32)
    src = jnp.concatenate([idx, (idx + 1) % num_nodes])
    dst = jnp.concatenate([(idx + 1) % num_nodes, idx])
    edge_index = jnp.stack([src, dst], axis=0)          # [2, 2N]
    batch = jnp.zeros((num_nodes,), jnp.int32)          # single graph

    params = init_params(kp, in_channels, hidden_channels, out_channels, nc)
    packed = pack_params(params, in_channels, hidden_channels, out_channels, nc)

    out, aux = gconvstack_words_forward(packed, x, edge_index, batch, hidden_channels)
    jax.block_until_ready(out)
    jax.block_until_ready(aux)

    assert out.shape == (num_nodes // 2, out_channels)
    assert aux[0].shape == (num_nodes // 2, 2 * hidden_channels)
    assert aux[1].shape == (num_nodes // 2, hidden_channels)
    assert aux[2].shape == (num_nodes // 2, hidden_channels)
    print("KERNEL_OK")
</pallas_src>

<mosaic_0001>
module attributes {stable_mosaic.version = 11 : i64} {
  func.func @conv_stack_kernel(%arg0: i32, %arg1: memref<16x16xbf16, #tpu.memory_space<vmem>>, %arg2: memref<16x128xbf16, #tpu.memory_space<vmem>>, %arg3: memref<1x256x128xbf16, #tpu.memory_space<vmem>>, %arg4: memref<1x1x128xf32, #tpu.memory_space<vmem>>, %arg5: memref<16x128xf32, #tpu.memory_space<vmem>>, %arg6: memref<16x128xf32, #tpu.memory_space<vmem>>) attributes {dimension_semantics = [#tpu.dimension_semantics<arbitrary>], iteration_bounds = array<i64: 2>, scalar_prefetch = 0 : i64, scratch_operands = 1 : i64, tpu.core_type = #tpu.core_type<tc>, window_params = [{pipeline_mode = #tpu.pipeline_mode<synchronous>, transform_indices = @transform_0, window_bounds = array<i64: 16, 16>}, {pipeline_mode = #tpu.pipeline_mode<synchronous>, transform_indices = @transform_1, window_bounds = array<i64: 16, 128>}, {transform_indices = @transform_2, window_bounds = array<i64: 1, 256, 128>}, {transform_indices = @transform_3, window_bounds = array<i64: 1, 1, 128>}, {pipeline_mode = #tpu.pipeline_mode<synchronous>, transform_indices = @transform_4, window_bounds = array<i64: 16, 128>}]} {
    %c0_i32 = arith.constant 0 : i32
    %0 = arith.cmpi eq, %arg0, %c0_i32 : i32
    %1 = arith.extui %0 : i1 to i32
    %c0_i32_0 = arith.constant 0 : i32
    %2 = arith.cmpi ne, %1, %c0_i32_0 : i32
    scf.if %2 {
      %c0_15 = arith.constant 0 : index
      %c0_16 = arith.constant 0 : index
      %22 = vector.load %arg2[%c0_15, %c0_16] : memref<16x128xbf16, #tpu.memory_space<vmem>>, vector<16x128xbf16>
      %23 = arith.extf %22 : vector<16x128xbf16> to vector<16x128xf32>
      %c0_17 = arith.constant 0 : index
      %c0_18 = arith.constant 0 : index
      %24 = vector.load %arg6[%c0_17, %c0_18] : memref<16x128xf32, #tpu.memory_space<vmem>>, vector<16x128xf32>
      tpu.vector_store %arg6[%c0_17, %c0_18], %23 {strides = array<i32>} : memref<16x128xf32, #tpu.memory_space<vmem>>, vector<16x128xf32>,
    } else {
    }
    %c0 = arith.constant 0 : index
    %c0_1 = arith.constant 0 : index
    %3 = vector.load %arg6[%c0, %c0_1] : memref<16x128xf32, #tpu.memory_space<vmem>>, vector<16x128xf32>
    %4 = arith.truncf %3 : vector<16x128xf32> to vector<16x128xbf16>
    %c0_2 = arith.constant 0 : index
    %c0_3 = arith.constant 0 : index
    %5 = vector.load %arg1[%c0_2, %c0_3] : memref<16x16xbf16, #tpu.memory_space<vmem>>, vector<16x16xbf16>
    %cst = arith.constant dense<0.000000e+00> : vector<16x128xf32>
    %6 = tpu.matmul %5, %4, %cst {dimension_numbers = #tpu.dot_dimension_numbers<[1], [0], [0], [1], [0, 0, 1, 1], [], []>} : vector<16x16xbf16>, vector<16x128xbf16>, vector<16x128xf32> -> vector<16x128xf32>
    %7 = arith.truncf %6 : vector<16x128xf32> to vector<16x128xbf16>
    %8 = tpu.concatenate %7, %4 in 1 : vector<16x128xbf16>, vector<16x128xbf16> -> vector<16x256xbf16>
    %c0_4 = arith.constant 0 : index
    %c0_5 = arith.constant 0 : index
    %c0_6 = arith.constant 0 : index
    %9 = vector.load %arg3[%c0_4, %c0_5, %c0_6] : memref<1x256x128xbf16, #tpu.memory_space<vmem>>, vector<1x256x128xbf16>
    %10 = vector.shape_cast %9 : vector<1x256x128xbf16> to vector<256x128xbf16>
    %cst_7 = arith.constant dense<0.000000e+00> : vector<16x128xf32>
    %11 = tpu.matmul %8, %10, %cst_7 {dimension_numbers = #tpu.dot_dimension_numbers<[1], [0], [0], [1], [0, 0, 1, 1], [], []>} : vector<16x256xbf16>, vector<256x128xbf16>, vector<16x128xf32> -> vector<16x128xf32>
    %c0_8 = arith.constant 0 : index
    %c0_9 = arith.constant 0 : index
    %c0_10 = arith.constant 0 : index
    %12 = vector.load %arg4[%c0_8, %c0_9, %c0_10] : memref<1x1x128xf32, #tpu.memory_space<vmem>>, vector<1x1x128xf32>
    %13 = vector.shape_cast %12 : vector<1x1x128xf32> to vector<1x128xf32>
    %14 = vector.broadcast %13 : vector<1x128xf32> to vector<16x128xf32>
    %15 = arith.addf %11, %14 : vector<16x128xf32>
    %cst_11 = arith.constant 0.000000e+00 : f32
    %16 = vector.broadcast %cst_11 : f32 to vector<16x128xf32>
    %17 = arith.maximumf %15, %16 : vector<16x128xf32>
    %c0_12 = arith.constant 0 : index
    %c0_13 = arith.constant 0 : index
    %18 = vector.load %arg6[%c0_12, %c0_13] : memref<16x128xf32, #tpu.memory_space<vmem>>, vector<16x128xf32>
    tpu.vector_store %arg6[%c0_12, %c0_13], %17 {strides = array<i32>} : memref<16x128xf32, #tpu.memory_space<vmem>>, vector<16x128xf32>,
    %c1_i32 = arith.constant 1 : i32
    %19 = arith.cmpi eq, %arg0, %c1_i32 : i32
    %20 = arith.extui %19 : i1 to i32
    %c0_i32_14 = arith.constant 0 : i32
    %21 = arith.cmpi ne, %20, %c0_i32_14 : i32
    scf.if %21 {
      %c0_15 = arith.constant 0 : index
      %c0_16 = arith.constant 0 : index
      %22 = vector.load %arg6[%c0_15, %c0_16] : memref<16x128xf32, #tpu.memory_space<vmem>>, vector<16x128xf32>
      %c0_17 = arith.constant 0 : index
      %c0_18 = arith.constant 0 : index
      %23 = vector.load %arg5[%c0_17, %c0_18] : memref<16x128xf32, #tpu.memory_space<vmem>>, vector<16x128xf32>
      tpu.vector_store %arg5[%c0_17, %c0_18], %22 {strides = array<i32>} : memref<16x128xf32, #tpu.memory_space<vmem>>, vector<16x128xf32>,
    } else {
    }
    return
  }
  func.func @transform_0(%arg0: i32) -> (i32, i32) {
    %c0_i32 = arith.constant 0 : i32
    %c0_i32_0 = arith.constant 0 : i32
    %c0_i32_1 = arith.constant 0 : i32
    return %c0_i32, %c0_i32_0 : i32, i32
  }
  func.func @transform_1(%arg0: i32) -> (i32, i32) {
    %c0_i32 = arith.constant 0 : i32
    %c0_i32_0 = arith.constant 0 : i32
    %c0_i32_1 = arith.constant 0 : i32
    return %c0_i32, %c0_i32_0 : i32, i32
  }
  func.func @transform_2(%arg0: i32) -> (i32, i32, i32) {
    %c0_i32 = arith.constant 0 : i32
    %c0_i32_0 = arith.constant 0 : i32
    %c0_i32_1 = arith.constant 0 : i32
    return %arg0, %c0_i32, %c0_i32_0 : i32, i32, i32
  }
  func.func @transform_3(%arg0: i32) -> (i32, i32, i32) {
    %c0_i32 = arith.constant 0 : i32
    %c0_i32_0 = arith.constant 0 : i32
    %c0_i32_1 = arith.constant 0 : i32
    return %arg0, %c0_i32, %c0_i32_0 : i32, i32, i32
  }
  func.func @transform_4(%arg0: i32) -> (i32, i32) {
    %c0_i32 = arith.constant 0 : i32
    %c0_i32_0 = arith.constant 0 : i32
    %c0_i32_1 = arith.constant 0 : i32
    return %c0_i32, %c0_i32_0 : i32, i32
  }
}

</mosaic_0001>

<llo_original>
// kernel: tpu_custom_call.1
$region0: #{tpu_custom_call.1}
  #allocation0 [shape = 'u32[]', space=smem, size = 0x4, offset = 0x4, fixed_abs, tag = 'smem constant byte address 0x4 - core index']
  #allocation1 [shape = 'u32[72,128]{1,0:T(1,128)}', space=vmem, size = 0x9000, scoped, tag = 'internal scratch']
  #allocation2 [shape = 'f32[16,128]{1,0:T(8,128)}', space=vmem, size = 0x2000, scoped, tag = 'scratch operand']
  %s0 = inlined_call_operand.hbm [shape: bf16[16,16], index: 0, kind: input, shape index: {}]
  %s1 = inlined_call_operand.hbm [shape: bf16[16,128], index: 1, kind: input, shape index: {}]
  %s2 = inlined_call_operand.hbm [shape: bf16[2,256,128], index: 2, kind: input, shape index: {}]
  %s3 = inlined_call_operand.vmem [shape: f32[2,1,128], index: 3, kind: input, shape index: {}]
  %s4 = inlined_call_operand.hbm [shape: f32[16,128], index: 4, kind: output, shape index: {}]
  %s5 = sld [smem:[#allocation0]]
  $region69: #{tpu_custom_call.1} parent=0
    _
  %s7 = ssub.s32 1, %s5
  %s8 = scalar_select 0, %s7, %s5
  $region1: #{tpu_custom_call.1} parent=0
    #allocation3 [shape = 'u8[4096]{0}', space=vmem, size = 0x1000, scoped, tag = 'input window, operand 0, single buffered']
    #allocation4 [shape = 's32[2]{0}', space=sflag, size = 0x8, scoped, tag = 'scoped memory for tpu_custom_call.1']
    #allocation5 [shape = 's32[2]{0}', space=sflag, size = 0x8, scoped, tag = 'scoped memory for tpu_custom_call.1']
    #allocation6 [shape = 'u8[4096]{0}', space=vmem, size = 0x1000, scoped, tag = 'input window, operand 1, single buffered']
    #allocation7 [shape = 's32[1]{0}', space=sflag, size = 0x4, scoped, tag = 'scoped memory for tpu_custom_call.1']
    #allocation8 [shape = 'u8[131072]{0}', space=vmem, size = 0x20000, scoped, tag = 'input window, operand 2']
    #allocation9 [shape = 'u8[8192]{0}', space=vmem, size = 0x2000, scoped, tag = 'output window, operand 0, single buffered']
    %9 = vsyncpa [#allocation4], 0
    %10 = vsyncpa [#allocation7], 0
    %11 = vsyncpa [#allocation5], 0
    loop: start=0, step=1, limit=4
    $region2: #{tpu_custom_call.1} parent=1 // loop_pre_header
      _
    $region3: #{tpu_custom_call.1} parent=1 // loop_header
      %s13 = sphi 0, %s17
      %p14 = scmp.ge.s32.totalorder %s13, 4
      %s21 = sphi 0, %s21
      %s23 = sphi 0, %s21
      %s24 = sphi 0, %s23
      %s38 = sphi 0, %s24
      %s42 = sphi 0, %s42
      %s44 = sphi 0, %s42
      %s45 = sphi 0, %s44
      %s59 = sphi 0, %s45
      %s65 = sphi 0, %s67
      %s68 = sphi 0, %s65
      %s69 = sphi 0, %s68
      %s85 = sphi 0, %s69
      %s91 = sphi 0, %s93
      %s94 = sphi 0, %s91
      %s95 = sphi 0, %s94
      %s111 = sphi 0, %s95
      %s115 = sphi 0, %s115
      %s117 = sphi 0, %s115
      %s118 = sphi 0, %s117
      %s132 = sphi 0, %s118
    $region4: #{tpu_custom_call.1} parent=1 // loop_header_branch
      %16 = sbr.rel (%p14) target = $region8
    $region5: #{tpu_custom_call.1} parent=1 // loop_body
      %s18 = ssub.s32 %s13, 1
      %s19 = ssub.s32 %s13, 2
      %s20 = sadd.s32 %s13, 1
      %s22 = sadd.s32 %s21, 1
      %p25 = scmp.eq.s32.totalorder %s13, 1
      %p26 = scmp.ne.s32.totalorder %s21, %s23
      %p27 = scmp.eq.s32.totalorder %s13, 0
      %p28 = por %p26, %p27
      %p29 = scmp.ne.s32.totalorder %s21, %s23
      %p30 = scmp.eq.s32.totalorder %s18, 1
      %p31 = por %p29, %p30
      %p32 = scmp.ne.s32.totalorder %s23, %s24
      %p33 = scmp.eq.s32.totalorder %s18, 0
      %p34 = por %p32, %p33
      %p35 = scmp.ne.s32.totalorder %s23, %s24
      %p36 = scmp.eq.s32.totalorder %s19, 1
      %p37 = por %p35, %p36
      %p39 = scmp.ne.s32.totalorder %s24, %s38
      %p40 = scmp.eq.s32.totalorder %s19, 0
      %p41 = por %p39, %p40
      %s43 = sadd.s32 %s42, 1
      %p46 = scmp.eq.s32.totalorder %s13, 1
      %p47 = scmp.ne.s32.totalorder %s42, %s44
      %p48 = scmp.eq.s32.totalorder %s13, 0
      %p49 = por %p47, %p48
      %p50 = scmp.ne.s32.totalorder %s42, %s44
      %p51 = scmp.eq.s32.totalorder %s18, 1
      %p52 = por %p50, %p51
      %p53 = scmp.ne.s32.totalorder %s44, %s45
      %p54 = scmp.eq.s32.totalorder %s18, 0
      %p55 = por %p53, %p54
      %p56 = scmp.ne.s32.totalorder %s44, %s45
      %p57 = scmp.eq.s32.totalorder %s19, 1
      %p58 = por %p56, %p57
      %p60 = scmp.ne.s32.totalorder %s45, %s59
      %p61 = scmp.eq.s32.totalorder %s19, 0
      %p62 = por %p60, %p61
      %s63 = ssub.s32 %s13, %s20
      %p64 = scmp.eq.s32.totalorder %s63, 0
      %s66 = sadd.s32 %s65, 1
      %s67 = scalar_select %p64, %s65, %s66
      %p70 = pneg %p64
      %p71 = scmp.eq.s32.totalorder %s13, 1
      %p72 = por %p70, %p71
      %p73 = scmp.ne.s32.totalorder %s65, %s68
      %p74 = scmp.eq.s32.totalorder %s13, 0
      %p75 = por %p73, %p74
      %p76 = scmp.ne.s32.totalorder %s65, %s68
      %p77 = scmp.eq.s32.totalorder %s18, 1
      %p78 = por %p76, %p77
      %p79 = scmp.ne.s32.totalorder %s68, %s69
      %p80 = scmp.eq.s32.totalorder %s18, 0
      %p81 = por %p79, %p80
      %p82 = scmp.ne.s32.totalorder %s68, %s69
      %p83 = scmp.eq.s32.totalorder %s19, 1
      %p84 = por %p82, %p83
      %p86 = scmp.ne.s32.totalorder %s69, %s85
      %p87 = scmp.eq.s32.totalorder %s19, 0
      %p88 = por %p86, %p87
      %s89 = ssub.s32 %s13, %s20
      %p90 = scmp.eq.s32.totalorder %s89, 0
      %s92 = sadd.s32 %s91, 1
      %s93 = scalar_select %p90, %s91, %s92
      %p96 = pneg %p90
      %p97 = scmp.eq.s32.totalorder %s13, 1
      %p98 = por %p96, %p97
      %p99 = scmp.ne.s32.totalorder %s91, %s94
      %p100 = scmp.eq.s32.totalorder %s13, 0
      %p101 = por %p99, %p100
      %p102 = scmp.ne.s32.totalorder %s91, %s94
      %p103 = scmp.eq.s32.totalorder %s18, 1
      %p104 = por %p102, %p103
      %p105 = scmp.ne.s32.totalorder %s94, %s95
      %p106 = scmp.eq.s32.totalorder %s18, 0
      %p107 = por %p105, %p106
      %p108 = scmp.ne.s32.totalorder %s94, %s95
      %p109 = scmp.eq.s32.totalorder %s19, 1
      %p110 = por %p108, %p109
      %p112 = scmp.ne.s32.totalorder %s95, %s111
      %p113 = scmp.eq.s32.totalorder %s19, 0
      %p114 = por %p112, %p113
      %s116 = sadd.s32 %s115, 1
      %p119 = scmp.eq.s32.totalorder %s13, 1
      %p120 = scmp.ne.s32.totalorder %s115, %s117
      %p121 = scmp.eq.s32.totalorder %s13, 0
      %p122 = por %p120, %p121
      %p123 = scmp.ne.s32.totalorder %s115, %s117
      %p124 = scmp.eq.s32.totalorder %s18, 1
      %p125 = por %p123, %p124
      %p126 = scmp.ne.s32.totalorder %s117, %s118
      %p127 = scmp.eq.s32.totalorder %s18, 0
      %p128 = por %p126, %p127
      %p129 = scmp.ne.s32.totalorder %s117, %s118
      %p130 = scmp.eq.s32.totalorder %s19, 1
      %p131 = por %p129, %p130
      %p133 = scmp.ne.s32.totalorder %s118, %s132
      %p134 = scmp.eq.s32.totalorder %s19, 0
      %p135 = por %p133, %p134
      %p136 = scmp.le.s32.totalorder 1, %s13
      %p137 = scmp.lt.s32.totalorder %s13, 3
      %p138 = pnand %p136, %p137
      %p139 = pneg %p138
      // Predicated region
      $region9: #{tpu_custom_call.1} parent=5 // pred_check
        _
      $region10: #{tpu_custom_call.1} parent=5 // pred_check_branch
        %141 = sbr.rel (%p138) target = $region12
      $region11: #{tpu_custom_call.1} parent=5 // pred_region
        %s142 = ssub.s32 %s13, 1
        // Predicated region
        $region13: #{tpu_custom_call.1} parent=11 // pred_check
          %p143 = pneg %p34
        $region14: #{tpu_custom_call.1} parent=11 // pred_check_branch
          %145 = sbr.rel (%p143) target = $region16
        $region15: #{tpu_custom_call.1} parent=11 // pred_region
          %147 = vsyncadd [#allocation4], 0
          %s148 = sshll.u32 %s0, 4
          %s149 = int_to_ptr.hbm [resolvable:$true] %s148
          %s150 = sshll.u32 [#allocation3], 4
          %s151 = int_to_ptr.vmem [resolvable:$true] %s150
          %156 = dma.hbm_to_vmem [thread:$0]  %s149, 128, %s151, [#allocation4], 64, 64, 4
        $region16: #{tpu_custom_call.1} parent=11 // pred_fallthru
          _
        // Predicated region
        $region17: #{tpu_custom_call.1} parent=11 // pred_check
          %p157 = pneg %p55
        $region18: #{tpu_custom_call.1} parent=11 // pred_check_branch
          %159 = sbr.rel (%p157) target = $region20
        $region19: #{tpu_custom_call.1} parent=11 // pred_region
          %161 = vsyncadd [#allocation7], 0
          %s162 = sshll.u32 %s1, 4
          %s163 = int_to_ptr.hbm [resolvable:$true] %s162
          %s164 = sshll.u32 [#allocation6], 4
          %s165 = int_to_ptr.vmem [resolvable:$true] %s164
          %170 = dma.hbm_to_vmem [thread:$0]  %s163, 128, %s165, [#allocation7], 64, 64, 4
        $region20: #{tpu_custom_call.1} parent=11 // pred_fallthru
          _
      $region12: #{tpu_custom_call.1} parent=5 // pred_fallthru
        _
      %p171 = scmp.lt.s32.totalorder %s13, 2
      // Predicated region
      $region21: #{tpu_custom_call.1} parent=5 // pred_check
        %p172 = pneg %p171
      $region22: #{tpu_custom_call.1} parent=5 // pred_check_branch
        %174 = sbr.rel (%p172) target = $region24
      $region23: #{tpu_custom_call.1} parent=5 // pred_region
        // Predicated region
        $region25: #{tpu_custom_call.1} parent=23 // pred_check
          %p175 = pneg %p75
        $region26: #{tpu_custom_call.1} parent=23 // pred_check_branch
          %177 = sbr.rel (%p175) target = $region28
        $region27: #{tpu_custom_call.1} parent=23 // pred_region
          %s178 = sand.u32 %s13, 1
          %s179 = scalar_lea.sflag [#allocation4], %s178
          %s180 = sand.u32 %s65, 1
          %s181 = smul.addr %s180, 128
          %s182 = scalar_lea.vmem [#allocation8], %s181
          %184 = vsyncadd %s179, 0
          %s185 = smul.addr %s13, 32
          %s186 = smul.addr %s185, 4
          %s187 = scalar_lea.hbm %s2, %s186
          %s188 = sshll.u32 %s187, 4
          %s189 = int_to_ptr.hbm [resolvable:$true] %s188
          %s190 = sshll.u32 %s182, 4
          %s191 = int_to_ptr.vmem [resolvable:$true] %s190
          %196 = dma.hbm_to_vmem [thread:$0]  %s189, 2048, %s191, %s179, 64, 64, 4
        $region28: #{tpu_custom_call.1} parent=23 // pred_fallthru
          _
        // Predicated region
        $region29: #{tpu_custom_call.1} parent=23 // pred_check
          %p197 = pneg %p101
        $region30: #{tpu_custom_call.1} parent=23 // pred_check_branch
          %199 = sbr.rel (%p197) target = $region32
        $region31: #{tpu_custom_call.1} parent=23 // pred_region
          %p200 = scmp.lt.s32.totalorder %s13, 1
          %s201 = scalar_select %p200, %s13, 1
          %s202 = scalar_lea.vmem %s3, %s201
        $region32: #{tpu_custom_call.1} parent=23 // pred_fallthru
          _
      $region24: #{tpu_custom_call.1} parent=5 // pred_fallthru
        _
      %p203 = scmp.le.s32.totalorder 1, %s13
      %p204 = scmp.lt.s32.totalorder %s13, 3
      %p205 = pnand %p203, %p204
      %p206 = pneg %p205
      // Predicated region
      $region33: #{tpu_custom_call.1} parent=5 // pred_check
        _
      $region34: #{tpu_custom_call.1} parent=5 // pred_check_branch
        %208 = sbr.rel (%p205) target = $region36
      $region35: #{tpu_custom_call.1} parent=5 // pred_region
        %s209 = ssub.s32 %s13, 1
        // Predicated region
        $region37: #{tpu_custom_call.1} parent=35 // pred_check
          %p210 = pneg %p34
        $region38: #{tpu_custom_call.1} parent=35 // pred_check_branch
          %212 = sbr.rel (%p210) target = $region40
        $region39: #{tpu_custom_call.1} parent=35 // pred_region
          %214 = dma.done [#allocation4], 128
        $region40: #{tpu_custom_call.1} parent=35 // pred_fallthru
          _
        // Predicated region
        $region41: #{tpu_custom_call.1} parent=35 // pred_check
          %p215 = pneg %p55
        $region42: #{tpu_custom_call.1} parent=35 // pred_check_branch
          %217 = sbr.rel (%p215) target = $region44
        $region43: #{tpu_custom_call.1} parent=35 // pred_region
          %219 = dma.done [#allocation7], 128
        $region44: #{tpu_custom_call.1} parent=35 // pred_fallthru
          _
        %s220 = sand.u32 %s18, 1
        %s221 = scalar_lea.sflag [#allocation4], %s220
        %s222 = sand.u32 %s68, 1
        %s223 = smul.addr %s222, 128
        %s224 = scalar_lea.vmem [#allocation8], %s223
        // Predicated region
        $region45: #{tpu_custom_call.1} parent=35 // pred_check
          %p225 = pneg %p81
        $region46: #{tpu_custom_call.1} parent=35 // pred_check_branch
          %227 = sbr.rel (%p225) target = $region48
        $region47: #{tpu_custom_call.1} parent=35 // pred_region
          %229 = dma.done %s221, 2048
        $region48: #{tpu_custom_call.1} parent=35 // pred_fallthru
          _
        %p230 = pneg %p34
        %p231 = pneg %p31
        %p232 = pneg %p55
        %p233 = pneg %p52
        %s234 = sand.u32 %s18, 1
        %s235 = scalar_lea.sflag [#allocation4], %s234
        %s236 = sand.u32 %s68, 1
        %s237 = smul.addr %s236, 128
        %s238 = scalar_lea.vmem [#allocation8], %s237
        %p239 = pneg %p81
        %p240 = pneg %p78
        %p241 = scmp.lt.s32.totalorder %s18, 1
        %s242 = scalar_select %p241, %s18, 1
        %s243 = scalar_lea.vmem %s3, %s242
        %p244 = pneg %p107
        %p245 = pneg %p104
        %p246 = pneg %p128
        %p247 = pneg %p125
        %p248 = scmp.lt.s32.totalorder %s18, 1
        %s249 = scalar_select %p248, %s18, 1
        %s250 = scalar_lea.vmem %s3, %s249
        %p252 = scmp.eq.s32.totalorder %s18, 0
        // Predicated region
        $region49: #{tpu_custom_call.1} parent=35 // pred_check
          %p253 = pneg %p252
        $region50: #{tpu_custom_call.1} parent=35 // pred_check_branch
          %255 = sbr.rel (%p253) target = $region52
        $region51: #{tpu_custom_call.1} parent=35 // pred_region
          %v256 = vld [vmem:[#allocation6] sm:$0xf]
          %v257 = vld [vmem:[#allocation6 + $0x4] sm:$0xf]
          %v258 = vunpack.c.l.bf16 %v256
          %v259 = vunpack.c.l.bf16 %v257
          %260 = vst [vmem:[#allocation2] sm:$0xff] %v258
          %261 = vst [vmem:[#allocation2 + $0x8] sm:$0xff] %v259
        $region52: #{tpu_custom_call.1} parent=35 // pred_fallthru
          _
        %v262 = vld [vmem:[#allocation2] sm:$0xff]
        %v263 = vld [vmem:[#allocation2 + $0x8] sm:$0xff]
        %v264 = vpack.c.bf16 %v262, %v262
        %v265 = vpack.c.bf16 %v263, %v263
        %v266 = vld [vmem:[#allocation3] sm:$0xf]
        %v267 = vld [vmem:[#allocation3 + $0x4] sm:$0xf]
        %v270 = vunpack.c.l.b16 %v266
        %v271 = vunpack.c.l.b16 %v267
        %v272 = vpack.c.b16 %v271, %v270
        %v275 = vunpack.c.l.b16 %v264
        %v276 = vunpack.c.l.b16 %v265
        %v277 = vpack.c.b16 %v276, %v275
        %vm279 = vcmask 130048
        %v281 = vsel %vm279, %v272, 0
        %283 = vmatpush.bf16.msra.mxu0 0
        %284 = vmatpush.bf16.msra.mxu0 0
        %285 = vmatpush.bf16.msra.mxu0 0
        %286 = vmatpush.bf16.msra.mxu0 0
        %287 = vmatpush.bf16.msra.mxu0 0
        %288 = vmatpush.bf16.msra.mxu0 0
        %289 = vmatpush.bf16.msra.mxu0 0
        %290 = vmatpush.bf16.msra.mxu0 %v277
        %291 = vmatmul.bf16.gmra.mxu0 %v281
        %v292 = vpop.f32.mrf.mxu0
        %v293 = vadd.f32 0.0, %v292
        %v294 = vpop.f32.mrf.mxu0
        %v295 = vadd.f32 0.0, %v294
        %296 = vdwg.mxu0
        %v297 = vpack.c.bf16 %v293, %v293
        %v298 = vpack.c.bf16 %v295, %v295
        %v301 = vunpack.c.l.b16 %v297
        %v302 = vunpack.c.l.b16 %v298
        %v303 = vpack.c.b16 %v302, %v301
        %v305 = vld [vmem:[%s224] sm:$0xf]
        %v306 = vld [vmem:[%s224 + $0x4] sm:$0xf]
        %v307 = vld [vmem:[%s224 + $0x8] sm:$0xf]
        %v308 = vld [vmem:[%s224 + $0xc] sm:$0xf]
        %v309 = vld [vmem:[%s224 + $0x10] sm:$0xf]
        %v310 = vld [vmem:[%s224 + $0x14] sm:$0xf]
        %v311 = vld [vmem:[%s224 + $0x18] sm:$0xf]
        %v312 = vld [vmem:[%s224 + $0x1c] sm:$0xf]
        %v313 = vld [vmem:[%s224 + $0x20] sm:$0xf]
        %v314 = vld [vmem:[%s224 + $0x24] sm:$0xf]
        %v315 = vld [vmem:[%s224 + $0x28] sm:$0xf]
        %v316 = vld [vmem:[%s224 + $0x2c] sm:$0xf]
        %v317 = vld [vmem:[%s224 + $0x30] sm:$0xf]
        %v318 = vld [vmem:[%s224 + $0x34] sm:$0xf]
        %v319 = vld [vmem:[%s224 + $0x38] sm:$0xf]
        %v320 = vld [vmem:[%s224 + $0x3c] sm:$0xf]
        %v321 = vld [vmem:[%s224 + $0x40] sm:$0xf]
        %v322 = vld [vmem:[%s224 + $0x44] sm:$0xf]
        %v323 = vld [vmem:[%s224 + $0x48] sm:$0xf]
        %v324 = vld [vmem:[%s224 + $0x4c] sm:$0xf]
        %v325 = vld [vmem:[%s224 + $0x50] sm:$0xf]
        %v326 = vld [vmem:[%s224 + $0x54] sm:$0xf]
        %v327 = vld [vmem:[%s224 + $0x58] sm:$0xf]
        %v328 = vld [vmem:[%s224 + $0x5c] sm:$0xf]
        %v329 = vld [vmem:[%s224 + $0x60] sm:$0xf]
        %v330 = vld [vmem:[%s224 + $0x64] sm:$0xf]
        %v331 = vld [vmem:[%s224 + $0x68] sm:$0xf]
        %v332 = vld [vmem:[%s224 + $0x6c] sm:$0xf]
        %v333 = vld [vmem:[%s224 + $0x70] sm:$0xf]
        %v334 = vld [vmem:[%s224 + $0x74] sm:$0xf]
        %v335 = vld [vmem:[%s224 + $0x78] sm:$0xf]
        %v336 = vld [vmem:[%s224 + $0x7c] sm:$0xf]
        %v337 = vld [vmem:[%s250] sm:$0x1]
        %v339 = vperm.slane %v337, 0
        %v373 = vunpack.c.l.b16 %v305
        %v374 = vunpack.c.l.b16 %v306
        %v375 = vunpack.c.l.b16 %v307
        %v376 = vunpack.c.l.b16 %v308
        %v377 = vunpack.c.l.b16 %v309
        %v378 = vunpack.c.l.b16 %v310
        %v379 = vunpack.c.l.b16 %v311
        %v380 = vunpack.c.l.b16 %v312
        %v381 = vunpack.c.l.b16 %v313
        %v382 = vunpack.c.l.b16 %v314
        %v383 = vunpack.c.l.b16 %v315
        %v384 = vunpack.c.l.b16 %v316
        %v385 = vunpack.c.l.b16 %v317
        %v386 = vunpack.c.l.b16 %v318
        %v387 = vunpack.c.l.b16 %v319
        %v388 = vunpack.c.l.b16 %v320
        %v389 = vunpack.c.l.b16 %v321
        %v390 = vunpack.c.l.b16 %v322
        %v391 = vunpack.c.l.b16 %v323
        %v392 = vunpack.c.l.b16 %v324
        %v393 = vunpack.c.l.b16 %v325
        %v394 = vunpack.c.l.b16 %v326
        %v395 = vunpack.c.l.b16 %v327
        %v396 = vunpack.c.l.b16 %v328
        %v397 = vunpack.c.l.b16 %v329
        %v398 = vunpack.c.l.b16 %v330
        %v399 = vunpack.c.l.b16 %v331
        %v400 = vunpack.c.l.b16 %v332
        %v401 = vunpack.c.l.b16 %v333
        %v402 = vunpack.c.l.b16 %v334
        %v403 = vunpack.c.l.b16 %v335
        %v404 = vunpack.c.l.b16 %v336
        %v405 = vpack.c.b16 %v374, %v373
        %v406 = vpack.c.b16 %v376, %v375
        %v407 = vpack.c.b16 %v378, %v377
        %v408 = vpack.c.b16 %v380, %v379
        %v409 = vpack.c.b16 %v382, %v381
        %v410 = vpack.c.b16 %v384, %v383
        %v411 = vpack.c.b16 %v386, %v385
        %v412 = vpack.c.b16 %v388, %v387
        %v413 = vpack.c.b16 %v390, %v389
        %v414 = vpack.c.b16 %v392, %v391
        %v415 = vpack.c.b16 %v394, %v393
        %v416 = vpack.c.b16 %v396, %v395
        %v417 = vpack.c.b16 %v398, %v397
        %v418 = vpack.c.b16 %v400, %v399
        %v419 = vpack.c.b16 %v402, %v401
        %v420 = vpack.c.b16 %v404, %v403
        %437 = vmatpush.bf16.msra.mxu0 %v412
        %438 = vmatpush.bf16.msra.mxu0 %v411
        %439 = vmatpush.bf16.msra.mxu0 %v410
        %440 = vmatpush.bf16.msra.mxu0 %v409
        %441 = vmatpush.bf16.msra.mxu0 %v408
        %442 = vmatpush.bf16.msra.mxu0 %v407
        %443 = vmatpush.bf16.msra.mxu0 %v406
        %444 = vmatpush.bf16.msra.mxu0 %v405
        %445 = vmatmul.bf16.gmra.mxu0 %v303
        %v446 = vpop.f32.mrf.mxu0
        %v447 = vadd.f32 %v339, %v446
        %v448 = vpop.f32.mrf.mxu0
        %v449 = vadd.f32 %v339, %v448
        %450 = vdwg.mxu0
        %451 = vmatpush.bf16.msra.mxu0 %v420
        %452 = vmatpush.bf16.msra.mxu0 %v419
        %453 = vmatpush.bf16.msra.mxu0 %v418
        %454 = vmatpush.bf16.msra.mxu0 %v417
        %455 = vmatpush.bf16.msra.mxu0 %v416
        %456 = vmatpush.bf16.msra.mxu0 %v415
        %457 = vmatpush.bf16.msra.mxu0 %v414
        %458 = vmatpush.bf16.msra.mxu0 %v413
        %459 = vmatmul.bf16.gmra.mxu0 %v277
        %v460 = vpop.f32.mrf.mxu0
        %v461 = vadd.f32 %v447, %v460
        %v462 = vpop.f32.mrf.mxu0
        %v463 = vadd.f32 %v449, %v462
        %464 = vdwg.mxu0
        %v465 = vmax.f32 %v461, 0.0
        %v466 = vmax.f32 %v463, 0.0
        %467 = vst [vmem:[#allocation2] sm:$0xff] %v465
        %468 = vst [vmem:[#allocation2 + $0x8] sm:$0xff] %v466
        %p469 = scmp.eq.s32.totalorder %s18, 1
        // Predicated region
        $region53: #{tpu_custom_call.1} parent=35 // pred_check
          %p470 = pneg %p469
        $region54: #{tpu_custom_call.1} parent=35 // pred_check_branch
          %472 = sbr.rel (%p470) target = $region56
        $region55: #{tpu_custom_call.1} parent=35 // pred_region
          %v473 = vld [vmem:[#allocation2] sm:$0xff]
          %v474 = vld [vmem:[#allocation2 + $0x8] sm:$0xff]
          %475 = vst [vmem:[#allocation9] sm:$0xff] %v473
          %476 = vst [vmem:[#allocation9 + $0x8] sm:$0xff] %v474
        $region56: #{tpu_custom_call.1} parent=35 // pred_fallthru
          _
        // Predicated region
        $region57: #{tpu_custom_call.1} parent=35 // pred_check
          %p477 = pneg %p125
        $region58: #{tpu_custom_call.1} parent=35 // pred_check_branch
          %479 = sbr.rel (%p477) target = $region60
        $region59: #{tpu_custom_call.1} parent=35 // pred_region
          %481 = vsyncadd [#allocation5], 0
          %s482 = sshll.u32 [#allocation9], 4
          %s483 = int_to_ptr.vmem [resolvable:$true] %s482
          %s484 = sshll.u32 %s4, 4
          %s485 = int_to_ptr.hbm [resolvable:$true] %s484
          %490 = dma.vmem_to_hbm [thread:$0]  %s483, 256, %s485, [#allocation5], 128, 128, 8
        $region60: #{tpu_custom_call.1} parent=35 // pred_fallthru
          _
        // Predicated region
        $region61: #{tpu_custom_call.1} parent=35 // pred_check
          %p491 = pneg %p125
        $region62: #{tpu_custom_call.1} parent=35 // pred_check_branch
          %493 = sbr.rel (%p491) target = $region64
        $region63: #{tpu_custom_call.1} parent=35 // pred_region
          %495 = dma.done [#allocation5], 256
        $region64: #{tpu_custom_call.1} parent=35 // pred_fallthru
          _
      $region36: #{tpu_custom_call.1} parent=5 // pred_fallthru
        _
      %p496 = scmp.le.s32.totalorder 2, %s13
      // Predicated region
      $region65: #{tpu_custom_call.1} parent=5 // pred_check
        %p497 = pneg %p496
      $region66: #{tpu_custom_call.1} parent=5 // pred_check_branch
        %499 = sbr.rel (%p497) target = $region68
      $region67: #{tpu_custom_call.1} parent=5 // pred_region
        %s500 = ssub.s32 %s13, 2
      $region68: #{tpu_custom_call.1} parent=5 // pred_fallthru
        _
    $region6: #{tpu_custom_call.1} parent=1 // loop_footer
      %s17 = sadd.s32 1, %s13
    $region7: #{tpu_custom_call.1} parent=1 // loop_footer_branch
      %12 = sbr.rel target = $region3
    $region8: #{tpu_custom_call.1} parent=1 // loop_exit
      _
    %501 = vsyncpa [#allocation4], 1
    %s502 = scalar_lea.sflag [#allocation4], 1
    %503 = vsyncpa %s502, 1
    %504 = vsyncpa [#allocation7], 1
    %505 = vsyncpa [#allocation5], 1
    %s506 = scalar_lea.sflag [#allocation5], 1
    %507 = vsyncpa %s506, 1

</llo_original>
